<compile_context>
chip_gen: v6e
topology: v6e:2x2x1
jax: 0.10.0
libtpu: 0.0.40
codegen_flags: <defaults>
</compile_context>

<pallas_src>
import jax
import jax.numpy as jnp
from jax import lax
from jax.experimental import pallas as pl
from jax.experimental.pallas import tpu as pltpu


# ---------------------------------------------------------------------------
# Pallas kernels
# ---------------------------------------------------------------------------
def _fused_downsample_kernel(p_ref, w_ref, b_ref, g_ref, beta_ref, o_ref):
    """conv33 + conv55 + channel concat in ONE MXU call, then bias + ReLU +
    LayerNorm on values, and exactly one dense store of the output block.

    p_ref : (K3+K5, TP) bf16   vertically stacked im2col columns [p3; p5],
                               lane axis = flattened (batch, spatial)
    w_ref : (2C, K3+K5) bf16   block-diagonal [w3 0; 0 w5] (resident)
    b_ref : (2C, 1) f32        concatenated conv biases (resident)
    g_ref, beta_ref : (2C, 1) f32  LayerNorm affine (resident)
    o_ref : (2C, TP) f32
    """
    acc = jnp.dot(w_ref[...], p_ref[...], preferred_element_type=jnp.float32)
    x = jnp.maximum(acc + b_ref[...], 0.0)                        # bias + ReLU
    # LayerNorm over the concatenated channel (sublane) axis, per lane column.
    mean = jnp.mean(x, axis=0, keepdims=True)
    var = jnp.mean(jnp.square(x - mean), axis=0, keepdims=True)   # biased, as torch
    y = (x - mean) * lax.rsqrt(var + 1e-5)
    o_ref[...] = y * g_ref[...] + beta_ref[...]                   # single dense store


def _conv_relu_kernel(w_ref, b_ref, p_ref, o_ref):
    """Standalone conv-as-matmul + bias + ReLU on one (batch, lane-tile) block.

    w_ref: (Cout, K) bf16 (resident), b_ref: (Cout, 1) f32 (resident),
    p_ref: (1, K, TP) bf16 patch tile, o_ref: (1, Cout, TP) f32.
    """
    acc = jnp.dot(w_ref[...], p_ref[0], preferred_element_type=jnp.float32)
    o_ref[0] = jnp.maximum(acc + b_ref[...], 0.0)


# ---------------------------------------------------------------------------
# Wrapper glue (padding / patch extraction stays in XLA)
# ---------------------------------------------------------------------------
def _im2col_nkp(x_nchw, k, stride, pad):
    """im2col with K on the middle axis (ordering (c, kh, kw)) and flattened
    spatial output last: returns (N, C*k*k, Ho*Wo), ho, wo.

    stride == k for this module, so windows are non-overlapping and the patch
    matrix duplicates no data (single pass over the padded input).
    """
    # TODO(synk): the pad + gather still materializes once in HBM; fusing the
    # strided gather into the kernel (stride == k, non-overlapping windows)
    # would remove one write + one read of the input for the standalone conv
    # at large image sizes.
    n, c, h, w = x_nchw.shape
    xp = jnp.pad(x_nchw, ((0, 0), (0, 0), (pad, pad), (pad, pad)))
    ho = (h + 2 * pad - k) // stride + 1
    wo = (w + 2 * pad - k) // stride + 1
    slabs = []
    for i in range(k):
        for j in range(k):
            slabs.append(
                xp[:, :, i:i + stride * (ho - 1) + 1:stride,
                         j:j + stride * (wo - 1) + 1:stride])        # (N,C,Ho,Wo)
    # (N, C, k*k, Ho, Wo) -> (N, C*k*k, Ho*Wo); K index = c*k*k + i*k + j,
    # which matches w_oihw.reshape(Cout, C*k*k) with no weight transpose.
    patches = jnp.stack(slabs, axis=2).reshape(n, c * k * k, ho * wo)
    return patches, ho, wo


def downsample_forward(x_nchw, params, *, lane_tile=2048):
    """Fused Pallas forward (single pallas_call). Returns xnew in NCHW.

    Batch is folded into the lane axis, so the output block is lane-dense and
    the whole batch runs in one (or a few, if N*Ho*Wo is large) grid steps.
    (The torch forward has no `return`; we return the computed xnew.)
    """
    n, cin, h, w = x_nchw.shape
    cout = params["w33"].shape[0]
    assert params["gamma"].shape[-1] == 2 * cout, (
        "LayerNorm(in_ch*2) only matches the concat width when out_ch == in_ch")

    p3, ho3, wo3 = _im2col_nkp(x_nchw, 3, 3, 1)
    p5, ho5, wo5 = _im2col_nkp(x_nchw, 5, 5, 1)
    assert (ho3, wo3) == (ho5, wo5), (
        "cat([conv33, conv55], channel) needs matching spatial outputs "
        "(only a 3x3 spatial input satisfies this)")
    p_len = ho3 * wo3
    k3, k5 = 9 * cin, 25 * cin
    kcat = k3 + k5
    lanes = n * p_len                      # merged (batch, spatial) lane axis

    # (N, K, P) -> (K, N*P): tiny tensors at the only legal input size (P=1),
    # so this relayout is negligible; it buys a lane-dense kernel output.
    p3m = jnp.transpose(p3, (1, 0, 2)).reshape(k3, lanes)
    p5m = jnp.transpose(p5, (1, 0, 2)).reshape(k5, lanes)
    p_cat = jnp.concatenate([p3m, p5m], axis=0).astype(jnp.bfloat16)

    w3 = params["w33"].reshape(cout, k3).astype(jnp.bfloat16)
    w5 = params["w55"].reshape(cout, k5).astype(jnp.bfloat16)
    # Block-diagonal weight: one jnp.dot yields both convs already concatenated
    # on the channel axis (the zero blocks are free — K pads to an MXU tile).
    w_cat = jnp.zeros((2 * cout, kcat), jnp.bfloat16)
    w_cat = w_cat.at[:cout, :k3].set(w3).at[cout:, k3:].set(w5)
    b_cat = jnp.concatenate([params["b33"], params["b55"]]
                            ).reshape(2 * cout, 1).astype(jnp.float32)
    g = params["gamma"].reshape(2 * cout, 1).astype(jnp.float32)
    beta = params["beta"].reshape(2 * cout, 1).astype(jnp.float32)

    # lane_tile is a multiple of 128; when lanes is smaller, use the full axis.
    tile = lanes if lanes <= lane_tile else lane_tile
    out = pl.pallas_call(
        _fused_downsample_kernel,
        out_shape=jax.ShapeDtypeStruct((2 * cout, lanes), jnp.float32),
        grid=(pl.cdiv(lanes, tile),),
        in_specs=[
            pl.BlockSpec((kcat, tile), lambda i: (0, i)),       # patch lane tile
            pl.BlockSpec((2 * cout, kcat), lambda i: (0, 0)),   # resident weight
            pl.BlockSpec((2 * cout, 1), lambda i: (0, 0)),      # resident bias
            pl.BlockSpec((2 * cout, 1), lambda i: (0, 0)),      # LN gamma
            pl.BlockSpec((2 * cout, 1), lambda i: (0, 0)),      # LN beta
        ],
        out_specs=pl.BlockSpec((2 * cout, tile), lambda i: (0, i)),
        compiler_params=pltpu.CompilerParams(
            dimension_semantics=("parallel",)),
    )(p_cat, w_cat, b_cat, g, beta)
    # (2C, N*P) -> (N, 2C, Ho, Wo). LayerNorm is per lane column, so any Pallas
    # lane padding in the last tile never feeds a cross-lane reduction.
    return jnp.transpose(out.reshape(2 * cout, n, ho3, wo3), (1, 0, 2, 3))


def conv2d_relu_pallas(x_nchw, w_oihw, bias, *, stride, pad, block_np=2048):
    """Standalone Conv2d(+bias)+ReLU as a lane-dense matmul kernel. Returns NCHW.

    Patches stay in (N, K, Ho*Wo) layout and the output is written directly as
    (N, Cout, Ho*Wo) via a 2-D (batch, lane-tile) grid — no XLA relayout
    transposes on either side.  Weights/bias stay resident across the grid.
    bf16 patch tile per step is ~K*block_np*2 bytes, far under the default
    scoped-VMEM limits on all generations at these K.
    """
    n, cin, h, w = x_nchw.shape
    cout, cin_w, kh, kw = w_oihw.shape
    assert cin_w == cin and kh == kw
    patches, ho, wo = _im2col_nkp(x_nchw, kh, stride, pad)          # (N, K, P)
    k_len = cin * kh * kw
    p_len = ho * wo
    patches = patches.astype(jnp.bfloat16)
    w_mat = w_oihw.reshape(cout, k_len).astype(jnp.bfloat16)
    b_col = bias.reshape(cout, 1).astype(jnp.float32)

    tile = p_len if p_len <= block_np else block_np
    out = pl.pallas_call(
        _conv_relu_kernel,
        out_shape=jax.ShapeDtypeStruct((n, cout, p_len), jnp.float32),
        grid=(n, pl.cdiv(p_len, tile)),
        in_specs=[
            pl.BlockSpec((cout, k_len), lambda b, i: (0, 0)),    # resident weight
            pl.BlockSpec((cout, 1), lambda b, i: (0, 0)),        # resident bias
            pl.BlockSpec((1, k_len, tile), lambda b, i: (b, 0, i)),
        ],
        out_specs=pl.BlockSpec((1, cout, tile), lambda b, i: (b, 0, i)),
        compiler_params=pltpu.CompilerParams(
            dimension_semantics=("parallel", "parallel")),
    )(w_mat, b_col, patches)
    # NOTE: a ragged last lane tile computes on Pallas-padded (garbage) patch
    # columns; safe because there is no cross-lane reduction and out-of-range
    # columns are write-masked.  Keep that invariant if the epilogue changes.
    return out.reshape(n, cout, ho, wo)        # already NCHW: reshape only


# ---------------------------------------------------------------------------
# Pure-JAX references (verification only; same bf16-operand / f32-accum math)
# ---------------------------------------------------------------------------
def _conv_relu_ref(x_nchw, w_oihw, bias, *, stride, pad):
    y = lax.conv_general_dilated(
        x_nchw.astype(jnp.bfloat16), w_oihw.astype(jnp.bfloat16),
        window_strides=(stride, stride), padding=((pad, pad), (pad, pad)),
        dimension_numbers=("NCHW", "OIHW", "NCHW"),
        preferred_element_type=jnp.float32)
    return jnp.maximum(y + bias.reshape(1, -1, 1, 1), 0.0)


def _forward_ref(x_nchw, params):
    x3 = _conv_relu_ref(x_nchw, params["w33"], params["b33"], stride=3, pad=1)
    x5 = _conv_relu_ref(x_nchw, params["w55"], params["b55"], stride=5, pad=1)
    cat = jnp.concatenate([x3, x5], axis=1)
    m = cat.mean(axis=1, keepdims=True)
    v = ((cat - m) ** 2).mean(axis=1, keepdims=True)
    y = (cat - m) / jnp.sqrt(v + 1e-5)
    return (y * params["gamma"].reshape(1, -1, 1, 1)
            + params["beta"].reshape(1, -1, 1, 1))


# ---------------------------------------------------------------------------
if __name__ == "__main__":
    key = jax.random.PRNGKey(0)
    in_ch = 8
    out_ch = 8  # out_ch == in_ch so LayerNorm(in_ch * 2) matches the concat width
    k_w33, k_b33, k_w55, k_b55, k_x, k_xbig = jax.random.split(key, 6)

    params = {
        "w33": 0.1 * jax.random.normal(k_w33, (out_ch, in_ch, 3, 3), jnp.float32),
        "b33": 0.1 * jax.random.normal(k_b33, (out_ch,), jnp.float32),
        "w55": 0.1 * jax.random.normal(k_w55, (out_ch, in_ch, 5, 5), jnp.float32),
        "b55": 0.1 * jax.random.normal(k_b55, (out_ch,), jnp.float32),
        "gamma": jnp.ones((in_ch * 2,), jnp.float32),   # nn.LayerNorm default init
        "beta": jnp.zeros((in_ch * 2,), jnp.float32),
    }

    # Full fused forward: 3x3 spatial is the only size where the conv33/conv55
    # outputs align for the channel concat.
    x = jax.random.normal(k_x, (2, in_ch, 3, 3), jnp.float32)        # NCHW
    y = downsample_forward(x, params)
    jax.block_until_ready(y)
    assert y.shape == (2, 2 * out_ch, 1, 1)
    y_ref = _forward_ref(x, params)
    assert jnp.allclose(y, y_ref, atol=2e-3, rtol=2e-3), float(
        jnp.max(jnp.abs(y - y_ref)))

    # Extra check of the standalone conv+ReLU kernel at a non-degenerate size.
    x_big = jax.random.normal(k_xbig, (2, in_ch, 16, 16), jnp.float32)
    x3 = conv2d_relu_pallas(x_big, params["w33"], params["b33"], stride=3, pad=1)
    x5 = conv2d_relu_pallas(x_big, params["w55"], params["b55"], stride=5, pad=1)
    jax.block_until_ready((x3, x5))
    assert x3.shape == (2, out_ch, 6, 6) and x5.shape == (2, out_ch, 3, 3)
    assert jnp.allclose(
        x3, _conv_relu_ref(x_big, params["w33"], params["b33"], stride=3, pad=1),
        atol=2e-3, rtol=2e-3)
    assert jnp.allclose(
        x5, _conv_relu_ref(x_big, params["w55"], params["b55"], stride=5, pad=1),
        atol=2e-3, rtol=2e-3)

    print("KERNEL_OK")
</pallas_src>

<mosaic_0001>
module attributes {stable_mosaic.version = 11 : i64} {
  func.func @_fused_downsample_kernel(%arg0: i32, %arg1: memref<272x2xbf16, #tpu.memory_space<vmem>>, %arg2: memref<16x272xbf16, #tpu.memory_space<vmem>>, %arg3: memref<16x1xf32, #tpu.memory_space<vmem>>, %arg4: memref<16x1xf32, #tpu.memory_space<vmem>>, %arg5: memref<16x1xf32, #tpu.memory_space<vmem>>, %arg6: memref<16x2xf32, #tpu.memory_space<vmem>>) attributes {dimension_semantics = [#tpu.dimension_semantics<parallel>], iteration_bounds = array<i64: 1>, scalar_prefetch = 0 : i64, scratch_operands = 0 : i64, tpu.core_type = #tpu.core_type<tc>, window_params = [{transform_indices = @transform_0, window_bounds = array<i64: 272, 2>}, {pipeline_mode = #tpu.pipeline_mode<synchronous>, transform_indices = @transform_1, window_bounds = array<i64: 16, 272>}, {pipeline_mode = #tpu.pipeline_mode<synchronous>, transform_indices = @transform_2, window_bounds = array<i64: 16, 1>}, {pipeline_mode = #tpu.pipeline_mode<synchronous>, transform_indices = @transform_3, window_bounds = array<i64: 16, 1>}, {pipeline_mode = #tpu.pipeline_mode<synchronous>, transform_indices = @transform_4, window_bounds = array<i64: 16, 1>}, {transform_indices = @transform_5, window_bounds = array<i64: 16, 2>}]} {
    %c0 = arith.constant 0 : index
    %c0_0 = arith.constant 0 : index
    %0 = vector.load %arg2[%c0, %c0_0] : memref<16x272xbf16, #tpu.memory_space<vmem>>, vector<16x272xbf16>
    %c0_1 = arith.constant 0 : index
    %c0_2 = arith.constant 0 : index
    %1 = vector.load %arg1[%c0_1, %c0_2] : memref<272x2xbf16, #tpu.memory_space<vmem>>, vector<272x2xbf16>
    %cst = arith.constant dense<0.000000e+00> : vector<16x2xf32>
    %2 = tpu.matmul %0, %1, %cst {dimension_numbers = #tpu.dot_dimension_numbers<[1], [0], [0], [1], [0, 0, 1, 1], [], []>} : vector<16x272xbf16>, vector<272x2xbf16>, vector<16x2xf32> -> vector<16x2xf32>
    %c0_3 = arith.constant 0 : index
    %c0_4 = arith.constant 0 : index
    %3 = vector.load %arg3[%c0_3, %c0_4] : memref<16x1xf32, #tpu.memory_space<vmem>>, vector<16x1xf32>
    %4 = vector.broadcast %3 : vector<16x1xf32> to vector<16x2xf32>
    %5 = arith.addf %2, %4 : vector<16x2xf32>
    %cst_5 = arith.constant 0.000000e+00 : f32
    %6 = vector.broadcast %cst_5 : f32 to vector<16x2xf32>
    %7 = arith.maximumf %5, %6 : vector<16x2xf32>
    %cst_6 = arith.constant dense<0.000000e+00> : vector<2xf32>
    %8 = vector.multi_reduction <add>, %7, %cst_6 [0] : vector<16x2xf32> to vector<2xf32>
    %9 = vector.shape_cast %8 : vector<2xf32> to vector<1x2xf32>
    %cst_7 = arith.constant 1.600000e+01 : f32
    %10 = vector.broadcast %cst_7 : f32 to vector<1x2xf32>
    %11 = arith.divf %9, %10 : vector<1x2xf32>
    %12 = vector.broadcast %11 : vector<1x2xf32> to vector<16x2xf32>
    %13 = arith.subf %7, %12 : vector<16x2xf32>
    %14 = arith.mulf %13, %13 : vector<16x2xf32>
    %cst_8 = arith.constant dense<0.000000e+00> : vector<2xf32>
    %15 = vector.multi_reduction <add>, %14, %cst_8 [0] : vector<16x2xf32> to vector<2xf32>
    %16 = vector.shape_cast %15 : vector<2xf32> to vector<1x2xf32>
    %cst_9 = arith.constant 1.600000e+01 : f32
    %17 = vector.broadcast %cst_9 : f32 to vector<1x2xf32>
    %18 = arith.divf %16, %17 : vector<1x2xf32>
    %19 = vector.broadcast %11 : vector<1x2xf32> to vector<16x2xf32>
    %20 = arith.subf %7, %19 : vector<16x2xf32>
    %cst_10 = arith.constant 9.99999974E-6 : f32
    %21 = vector.broadcast %cst_10 : f32 to vector<1x2xf32>
    %22 = arith.addf %18, %21 : vector<1x2xf32>
    %23 = math.rsqrt %22 : vector<1x2xf32>
    %24 = vector.broadcast %23 : vector<1x2xf32> to vector<16x2xf32>
    %25 = arith.mulf %20, %24 : vector<16x2xf32>
    %c0_11 = arith.constant 0 : index
    %c0_12 = arith.constant 0 : index
    %26 = vector.load %arg4[%c0_11, %c0_12] : memref<16x1xf32, #tpu.memory_space<vmem>>, vector<16x1xf32>
    %27 = vector.broadcast %26 : vector<16x1xf32> to vector<16x2xf32>
    %28 = arith.mulf %25, %27 : vector<16x2xf32>
    %c0_13 = arith.constant 0 : index
    %c0_14 = arith.constant 0 : index
    %29 = vector.load %arg5[%c0_13, %c0_14] : memref<16x1xf32, #tpu.memory_space<vmem>>, vector<16x1xf32>
    %30 = vector.broadcast %29 : vector<16x1xf32> to vector<16x2xf32>
    %31 = arith.addf %28, %30 : vector<16x2xf32>
    %c0_15 = arith.constant 0 : index
    %c0_16 = arith.constant 0 : index
    %32 = vector.load %arg6[%c0_15, %c0_16] : memref<16x2xf32, #tpu.memory_space<vmem>>, vector<16x2xf32>
    tpu.vector_store %arg6[%c0_15, %c0_16], %31 {strides = array<i32>} : memref<16x2xf32, #tpu.memory_space<vmem>>, vector<16x2xf32>,
    return
  }
  func.func @transform_0(%arg0: i32) -> (i32, i32) {
    %c0_i32 = arith.constant 0 : i32
    %c0_i32_0 = arith.constant 0 : i32
    return %c0_i32, %arg0 : i32, i32
  }
  func.func @transform_1(%arg0: i32) -> (i32, i32) {
    %c0_i32 = arith.constant 0 : i32
    %c0_i32_0 = arith.constant 0 : i32
    %c0_i32_1 = arith.constant 0 : i32
    return %c0_i32, %c0_i32_0 : i32, i32
  }
  func.func @transform_2(%arg0: i32) -> (i32, i32) {
    %c0_i32 = arith.constant 0 : i32
    %c0_i32_0 = arith.constant 0 : i32
    %c0_i32_1 = arith.constant 0 : i32
    return %c0_i32, %c0_i32_0 : i32, i32
  }
  func.func @transform_3(%arg0: i32) -> (i32, i32) {
    %c0_i32 = arith.constant 0 : i32
    %c0_i32_0 = arith.constant 0 : i32
    %c0_i32_1 = arith.constant 0 : i32
    return %c0_i32, %c0_i32_0 : i32, i32
  }
  func.func @transform_4(%arg0: i32) -> (i32, i32) {
    %c0_i32 = arith.constant 0 : i32
    %c0_i32_0 = arith.constant 0 : i32
    %c0_i32_1 = arith.constant 0 : i32
    return %c0_i32, %c0_i32_0 : i32, i32
  }
  func.func @transform_5(%arg0: i32) -> (i32, i32) {
    %c0_i32 = arith.constant 0 : i32
    %c0_i32_0 = arith.constant 0 : i32
    return %c0_i32, %arg0 : i32, i32
  }
}

</mosaic_0001>

<llo_original>
// kernel: tpu_custom_call.1
$region0: #{tpu_custom_call.1}
  #allocation0 [shape = 'u32[]', space=smem, size = 0x4, offset = 0x4, fixed_abs, tag = 'smem constant byte address 0x4 - core index']
  #allocation1 [shape = 'u32[144,128]{1,0:T(1,128)}', space=vmem, size = 0x12000, scoped, tag = 'internal scratch']
  %s0 = inlined_call_operand.vmem [shape: bf16[272,2], index: 0, kind: input, shape index: {}]
  %s1 = inlined_call_operand.vmem [shape: bf16[16,272], index: 1, kind: input, shape index: {}]
  %s2 = inlined_call_operand.vmem [shape: f32[16,1], index: 2, kind: input, shape index: {}]
  %s3 = inlined_call_operand.vmem [shape: f32[16,1], index: 3, kind: input, shape index: {}]
  %s4 = inlined_call_operand.vmem [shape: f32[16,1], index: 4, kind: input, shape index: {}]
  %s5 = inlined_call_operand.vmem [shape: f32[16,2], index: 5, kind: output, shape index: {}]
  %s6 = sld [smem:[#allocation0]]
  $region30: #{tpu_custom_call.1} parent=0
    _
  %s8 = ssub.s32 1, %s6
  %s9 = scalar_select 0, %s8, %s6
  // Predicated region
  $region2: #{tpu_custom_call.1} parent=0 // pred_check
    _
  $region3: #{tpu_custom_call.1} parent=0 // pred_check_branch
    %11 = sbr.rel (0) target = $region5
  $region4: #{tpu_custom_call.1} parent=0 // pred_region
    _
  $region5: #{tpu_custom_call.1} parent=0 // pred_fallthru
    _
  // Predicated region
  $region6: #{tpu_custom_call.1} parent=0 // pred_check
    _
  $region7: #{tpu_custom_call.1} parent=0 // pred_check_branch
    %13 = sbr.rel (0) target = $region9
  $region8: #{tpu_custom_call.1} parent=0 // pred_region
    _
  $region9: #{tpu_custom_call.1} parent=0 // pred_fallthru
    _
  // Predicated region
  $region10: #{tpu_custom_call.1} parent=0 // pred_check
    _
  $region11: #{tpu_custom_call.1} parent=0 // pred_check_branch
    %15 = sbr.rel (0) target = $region13
  $region12: #{tpu_custom_call.1} parent=0 // pred_region
    _
  $region13: #{tpu_custom_call.1} parent=0 // pred_fallthru
    _
  // Predicated region
  $region14: #{tpu_custom_call.1} parent=0 // pred_check
    _
  $region15: #{tpu_custom_call.1} parent=0 // pred_check_branch
    %17 = sbr.rel (0) target = $region17
  $region16: #{tpu_custom_call.1} parent=0 // pred_region
    _
  $region17: #{tpu_custom_call.1} parent=0 // pred_fallthru
    _
  // Predicated region
  $region18: #{tpu_custom_call.1} parent=0 // pred_check
    _
  $region19: #{tpu_custom_call.1} parent=0 // pred_check_branch
    %19 = sbr.rel (0) target = $region21
  $region20: #{tpu_custom_call.1} parent=0 // pred_region
    _
  $region21: #{tpu_custom_call.1} parent=0 // pred_fallthru
    _
  %v21 = vld [vmem:[%s1] sm:$0xff]
  %v22 = vld [vmem:[%s1 + $0x8] sm:$0xf]
  %v23 = vld [vmem:[%s1 + $0xc] sm:$0xff]
  %v24 = vld [vmem:[%s1 + $0x14] sm:$0xf]
  %v25 = vld [vmem:[%s0] sm:$0xf]
  %v26 = vld [vmem:[%s0 + $0x4] sm:$0xf]
  %v27 = vld [vmem:[%s0 + $0x8] sm:$0xf]
  %v28 = vld [vmem:[%s0 + $0xc] sm:$0xf]
  %v29 = vld [vmem:[%s0 + $0x10] sm:$0xf]
  %v30 = vld [vmem:[%s0 + $0x14] sm:$0xf]
  %v31 = vld [vmem:[%s0 + $0x18] sm:$0xf]
  %v32 = vld [vmem:[%s0 + $0x1c] sm:$0xf]
  %v33 = vld [vmem:[%s0 + $0x20] sm:$0xf]
  %v34 = vld [vmem:[%s0 + $0x24] sm:$0xf]
  %v35 = vld [vmem:[%s0 + $0x28] sm:$0xf]
  %v36 = vld [vmem:[%s0 + $0x2c] sm:$0xf]
  %v37 = vld [vmem:[%s0 + $0x30] sm:$0xf]
  %v38 = vld [vmem:[%s0 + $0x34] sm:$0xf]
  %v39 = vld [vmem:[%s0 + $0x38] sm:$0xf]
  %v40 = vld [vmem:[%s0 + $0x3c] sm:$0xf]
  %v41 = vld [vmem:[%s0 + $0x40] sm:$0xf]
  %v42 = vld [vmem:[%s0 + $0x44] sm:$0xf]
  %v43 = vld [vmem:[%s0 + $0x48] sm:$0xf]
  %v44 = vld [vmem:[%s0 + $0x4c] sm:$0xf]
  %v45 = vld [vmem:[%s0 + $0x50] sm:$0xf]
  %v46 = vld [vmem:[%s0 + $0x54] sm:$0xf]
  %v47 = vld [vmem:[%s0 + $0x58] sm:$0xf]
  %v48 = vld [vmem:[%s0 + $0x5c] sm:$0xf]
  %v49 = vld [vmem:[%s0 + $0x60] sm:$0xf]
  %v50 = vld [vmem:[%s0 + $0x64] sm:$0xf]
  %v51 = vld [vmem:[%s0 + $0x68] sm:$0xf]
  %v52 = vld [vmem:[%s0 + $0x6c] sm:$0xf]
  %v53 = vld [vmem:[%s0 + $0x70] sm:$0xf]
  %v54 = vld [vmem:[%s0 + $0x74] sm:$0xf]
  %v55 = vld [vmem:[%s0 + $0x78] sm:$0xf]
  %v56 = vld [vmem:[%s0 + $0x7c] sm:$0xf]
  %v57 = vld [vmem:[%s0 + $0x80] sm:$0xf]
  %v58 = vld [vmem:[%s0 + $0x84] sm:$0xf]
  %v59 = vld [vmem:[%s2] sm:$0xff]
  %v60 = vld [vmem:[%s2 + $0x8] sm:$0xff]
  %62 = vset.pattern.permute.xlu0 0
  %63 = vperm.xlu0 %62, %v59
  %v64 = vpop.permute.xlu0 %63
  %67 = vset.pattern.permute.xlu0 0
  %68 = vperm.xlu0 %67, %v60
  %v69 = vpop.permute.xlu0 %68
  %v75 = vunpack.c.l.b16 %v21
  %v76 = vunpack.c.h.b16 %v21
  %v77 = vunpack.c.l.b16 %v22
  %v78 = vunpack.c.l.b16 %v23
  %v79 = vunpack.c.h.b16 %v23
  %v80 = vunpack.c.l.b16 %v24
  %v81 = vpack.c.b16 %v78, %v75
  %v82 = vpack.c.b16 %v79, %v76
  %v83 = vpack.c.b16 %v80, %v77
  %v120 = vunpack.c.l.b16 %v25
  %v121 = vunpack.c.l.b16 %v26
  %v122 = vunpack.c.l.b16 %v27
  %v123 = vunpack.c.l.b16 %v28
  %v124 = vunpack.c.l.b16 %v29
  %v125 = vunpack.c.l.b16 %v30
  %v126 = vunpack.c.l.b16 %v31
  %v127 = vunpack.c.l.b16 %v32
  %v128 = vunpack.c.l.b16 %v33
  %v129 = vunpack.c.l.b16 %v34
  %v130 = vunpack.c.l.b16 %v35
  %v131 = vunpack.c.l.b16 %v36
  %v132 = vunpack.c.l.b16 %v37
  %v133 = vunpack.c.l.b16 %v38
  %v134 = vunpack.c.l.b16 %v39
  %v135 = vunpack.c.l.b16 %v40
  %v136 = vunpack.c.l.b16 %v41
  %v137 = vunpack.c.l.b16 %v42
  %v138 = vunpack.c.l.b16 %v43
  %v139 = vunpack.c.l.b16 %v44
  %v140 = vunpack.c.l.b16 %v45
  %v141 = vunpack.c.l.b16 %v46
  %v142 = vunpack.c.l.b16 %v47
  %v143 = vunpack.c.l.b16 %v48
  %v144 = vunpack.c.l.b16 %v49
  %v145 = vunpack.c.l.b16 %v50
  %v146 = vunpack.c.l.b16 %v51
  %v147 = vunpack.c.l.b16 %v52
  %v148 = vunpack.c.l.b16 %v53
  %v149 = vunpack.c.l.b16 %v54
  %v150 = vunpack.c.l.b16 %v55
  %v151 = vunpack.c.l.b16 %v56
  %v152 = vunpack.c.l.b16 %v57
  %v153 = vunpack.c.l.b16 %v58
  %v154 = vpack.c.b16 %v121, %v120
  %v155 = vpack.c.b16 %v123, %v122
  %v156 = vpack.c.b16 %v125, %v124
  %v157 = vpack.c.b16 %v127, %v126
  %v158 = vpack.c.b16 %v129, %v128
  %v159 = vpack.c.b16 %v131, %v130
  %v160 = vpack.c.b16 %v133, %v132
  %v161 = vpack.c.b16 %v135, %v134
  %v162 = vpack.c.b16 %v137, %v136
  %v163 = vpack.c.b16 %v139, %v138
  %v164 = vpack.c.b16 %v141, %v140
  %v165 = vpack.c.b16 %v143, %v142
  %v166 = vpack.c.b16 %v145, %v144
  %v167 = vpack.c.b16 %v147, %v146
  %v168 = vpack.c.b16 %v149, %v148
  %v169 = vpack.c.b16 %v151, %v150
  %v170 = vpack.c.b16 %v153, %v152
  %vm188 = vcmask 130048
  %v190 = vsel %vm188, %v83, 0
  %192 = vmatprep.subr.bf16.mxu0 0
  %193 = vmatpush1.bf16.msra.mxu0 %v161
  %194 = vmatprep.subr.bf16.mxu0 0
  %195 = vmatpush1.bf16.msra.mxu0 %v160
  %196 = vmatprep.subr.bf16.mxu0 0
  %197 = vmatpush1.bf16.msra.mxu0 %v159
  %198 = vmatprep.subr.bf16.mxu0 0
  %199 = vmatpush1.bf16.msra.mxu0 %v158
  %200 = vmatprep.subr.bf16.mxu0 0
  %201 = vmatpush1.bf16.msra.mxu0 %v157
  %202 = vmatprep.subr.bf16.mxu0 0
  %203 = vmatpush1.bf16.msra.mxu0 %v156
  %204 = vmatprep.subr.bf16.mxu0 0
  %205 = vmatpush1.bf16.msra.mxu0 %v155
  %206 = vmatprep.subr.bf16.mxu0 0
  %207 = vmatpush1.bf16.msra.mxu0 %v154
  %208 = vmatprep.subr.bf16.mxu0 0
  %209 = vmatpush2.bf16.msra.mxu0 %v169
  %210 = vmatprep.subr.bf16.mxu0 0
  %211 = vmatpush2.bf16.msra.mxu0 %v168
  %212 = vmatprep.subr.bf16.mxu0 0
  %213 = vmatpush2.bf16.msra.mxu0 %v167
  %214 = vmatprep.subr.bf16.mxu0 0
  %215 = vmatpush2.bf16.msra.mxu0 %v166
  %216 = vmatprep.subr.bf16.mxu0 0
  %217 = vmatpush2.bf16.msra.mxu0 %v165
  %218 = vmatprep.subr.bf16.mxu0 0
  %219 = vmatpush2.bf16.msra.mxu0 %v164
  %220 = vmatprep.subr.bf16.mxu0 0
  %221 = vmatpush2.bf16.msra.mxu0 %v163
  %222 = vmatprep.subr.bf16.mxu0 0
  %223 = vmatpush2.bf16.msra.mxu0 %v162
  %224 = vmatprep.mubr.bf16.mxu0 %v82
  %225 = vmatmul.mubr.bf16.gmra.mxu0 %v81
  %v226 = vpop.f32.mrf.mxu0
  %v227 = vadd.f32 %v64, %v226
  %v228 = vpop.f32.mrf.mxu0
  %v229 = vpop.f32.mrf.mxu0
  %v230 = vadd.f32 %v69, %v229
  %v231 = vpop.f32.mrf.mxu0
  %232 = vdwg.mxu0
  %233 = vmatprep.subr.bf16.mxu0 0
  %234 = vmatpush1.bf16.msra.mxu0 0
  %235 = vmatprep.subr.bf16.mxu0 0
  %236 = vmatpush1.bf16.msra.mxu0 0
  %237 = vmatprep.subr.bf16.mxu0 0
  %238 = vmatpush1.bf16.msra.mxu0 0
  %239 = vmatprep.subr.bf16.mxu0 0
  %240 = vmatpush1.bf16.msra.mxu0 0
  %241 = vmatprep.subr.bf16.mxu0 0
  %242 = vmatpush1.bf16.msra.mxu0 0
  %243 = vmatprep.subr.bf16.mxu0 0
  %244 = vmatpush1.bf16.msra.mxu0 0
  %245 = vmatprep.subr.bf16.mxu0 0
  %246 = vmatpush1.bf16.msra.mxu0 0
  %247 = vmatprep.subr.bf16.mxu0 0
  %248 = vmatpush1.bf16.msra.mxu0 %v170
  %249 = vmatprep.subr.bf16.mxu0 0
  %250 = vmatpush2.bf16.msra.mxu0 0
  %251 = vmatprep.subr.bf16.mxu0 0
  %252 = vmatpush2.bf16.msra.mxu0 0
  %253 = vmatprep.subr.bf16.mxu0 0
  %254 = vmatpush2.bf16.msra.mxu0 0
  %255 = vmatprep.subr.bf16.mxu0 0
  %256 = vmatpush2.bf16.msra.mxu0 0
  %257 = vmatprep.subr.bf16.mxu0 0
  %258 = vmatpush2.bf16.msra.mxu0 0
  %259 = vmatprep.subr.bf16.mxu0 0
  %260 = vmatpush2.bf16.msra.mxu0 0
  %261 = vmatprep.subr.bf16.mxu0 0
  %262 = vmatpush2.bf16.msra.mxu0 0
  %263 = vmatprep.subr.bf16.mxu0 0
  %264 = vmatpush2.bf16.msra.mxu0 0
  %265 = vmatprep.mubr.bf16.mxu0 0
  %266 = vmatmul.mubr.bf16.gmra.mxu0 %v190
  %v267 = vpop.f32.mrf.mxu0
  %v268 = vadd.f32 %v227, %v267
  %v269 = vpop.f32.mrf.mxu0
  %v270 = vpop.f32.mrf.mxu0
  %v271 = vadd.f32 %v230, %v270
  %v272 = vpop.f32.mrf.mxu0
  %273 = vdwg.mxu0
  %v274 = vmax.f32 %v268, 0.0
  %v275 = vmax.f32 %v271, 0.0
  %vm276 = vcmask 15360
  %v277 = vsel %vm276, %v274, 0.0
  %v278 = vsel %vm276, %v275, 0.0
  %v279 = vadd.f32 %v277, %v278
  %v280 = vrot.slane %v279, 4
  %v281 = vadd.f32 %v279, %v280
  %v282 = vrot.slane %v281, 2
  %v283 = vadd.f32 %v281, %v282
  %v284 = vrot.slane %v283, 1
  %v285 = vadd.f32 %v283, %v284
  %v286 = vrcp.pop 16.0
  %v287 = vmul.f32 %v285, %v286
  %v288 = vsub.f32 %v274, %v287
  %v289 = vsub.f32 %v275, %v287
  %v290 = vmul.f32 %v288, %v288
  %v291 = vmul.f32 %v289, %v289
  %v292 = vsel %vm276, %v290, 0.0
  %v293 = vsel %vm276, %v291, 0.0
  %v294 = vadd.f32 %v292, %v293
  %v295 = vrot.slane %v294, 4
  %v296 = vadd.f32 %v294, %v295
  %v297 = vrot.slane %v296, 2
  %v298 = vadd.f32 %v296, %v297
  %v299 = vrot.slane %v298, 1
  %v300 = vadd.f32 %v298, %v299
  %v301 = vmul.f32 %v300, %v286
  %v302 = vadd.f32 %v301, 1e-05
  %v303 = vrsqrt.pop %v302
  %v304 = vmul.f32 %v288, %v303
  %v305 = vmul.f32 %v289, %v303
  %v306 = vld [vmem:[%s3] sm:$0xff]
  %v307 = vld [vmem:[%s3 + $0x8] sm:$0xff]
  %309 = vset.pattern.permute.xlu0 0
  %310 = vperm.xlu0 %309, %v306
  %v311 = vpop.permute.xlu0 %310
  %314 = vset.pattern.permute.xlu0 0
  %315 = vperm.xlu0 %314, %v307
  %v316 = vpop.permute.xlu0 %315
  %v318 = vmul.f32 %v304, %v311
  %v319 = vmul.f32 %v305, %v316
  %v320 = vld [vmem:[%s4] sm:$0xff]
  %v321 = vld [vmem:[%s4 + $0x8] sm:$0xff]
  %323 = vset.pattern.permute.xlu0 0
  %324 = vperm.xlu0 %323, %v320
  %v325 = vpop.permute.xlu0 %324
  %328 = vset.pattern.permute.xlu0 0
  %329 = vperm.xlu0 %328, %v321
  %v330 = vpop.permute.xlu0 %329
  %v332 = vadd.f32 %v318, %v325
  %v333 = vadd.f32 %v319, %v330
  %334 = vst.msk [vmem:[%s5] sm:$0xff] %vm276, %v332
  %335 = vst.msk [vmem:[%s5 + $0x8] sm:$0xff] %vm276, %v333
  // Predicated region
  $region22: #{tpu_custom_call.1} parent=0 // pred_check
    _
  $region23: #{tpu_custom_call.1} parent=0 // pred_check_branch
    %337 = sbr.rel (0) target = $region25
  $region24: #{tpu_custom_call.1} parent=0 // pred_region
    _
  $region25: #{tpu_custom_call.1} parent=0 // pred_fallthru
    _
  // Predicated region
  $region26: #{tpu_custom_call.1} parent=0 // pred_check
    _
  $region27: #{tpu_custom_call.1} parent=0 // pred_check_branch
    %339 = sbr.rel (0) target = $region29
  $region28: #{tpu_custom_call.1} parent=0 // pred_region
    _
  $region29: #{tpu_custom_call.1} parent=0 // pred_fallthru
    _

</llo_original>
